<compile_context>
chip_gen: v7x
topology: tpu7x:2x2x1
jax: 0.10.0
libtpu: 0.0.40
codegen_flags: <defaults>
</compile_context>

<pallas_src>
import functools

import jax
import jax.numpy as jnp
from jax.experimental import pallas as pl
from jax.experimental.pallas import tpu as pltpu

EPS = 1e-4  # attentions.LayerNorm default eps in GlowTTS/VITS


def _duration_predictor_kernel(
    x_ref,     # (Bb*T, Cin) bf16  (x * mask), time-major, Bb sequences stacked
    mc_ref,    # (Bb*T, 1)   f32   sequence mask, column layout
    mr_ref,    # (Bb, T)     f32   sequence mask, row layout (for the output)
    tl_ref,    # (Bb*T, 1)   i32   local time index in [0, T), tiled per sequence
    w1_ref,    # (K, Cin, Cf) bf16
    b1_ref,    # (1, Cf) f32
    g1_ref,    # (1, Cf) f32
    be1_ref,   # (1, Cf) f32
    w2_ref,    # (K, Cf, Cf) bf16
    b2_ref,    # (1, Cf) f32
    g2_ref,    # (1, Cf) f32
    be2_ref,   # (1, Cf) f32
    wp_ref,    # (1, Cf) bf16
    bp_ref,    # (1, 1) f32
    o_ref,     # (Bb, T) f32
    *,
    K, T, Bb, Cf,
):
    P = K // 2
    n_rows = Bb * T
    mask_col = mc_ref[...]                       # (Bb*T, 1) f32
    t_local = tl_ref[...]                        # (Bb*T, 1) i32

    # Per-tap boundary validity columns (hoisted; shared by both convs).
    # Tap offset d pulls row t+d; rows whose source falls outside [0, T) of the
    # SAME sequence (including the wrap across stacked sequences) are zeroed.
    bmask = {}
    for d in range(1, P + 1):
        bmask[d] = (t_local < (T - d)).astype(jnp.float32)
        bmask[-d] = (t_local >= d).astype(jnp.float32)

    def conv_taps(inp_bf16, w_ref_, bias):
        """1-D 'same' conv as K accumulated matmuls with output-side shifts."""
        acc = jnp.zeros((n_rows, Cf), jnp.float32)
        for k in range(K):
            d = k - P
            y = jnp.dot(inp_bf16, w_ref_[k],
                        preferred_element_type=jnp.float32)       # (Bb*T, Cf)
            if d != 0:
                y = pltpu.roll(y, (-d) % n_rows, 0)               # y'[t] = y[t+d]
                y = y * bmask[d]
            acc = acc + y
        return acc + bias

    def layer_norm(h, g, be):
        # Fused single pass: sum and sum-of-squares are independent reductions.
        s1 = jnp.sum(h, axis=-1, keepdims=True)
        s2 = jnp.sum(h * h, axis=-1, keepdims=True)
        mu = s1 * (1.0 / Cf)
        var = s2 * (1.0 / Cf) - mu * mu
        return (h - mu) * jax.lax.rsqrt(var + EPS) * g + be

    # ---- conv_1 -> relu -> norm_1  (x pre-masked / bf16-cast in the wrapper)
    h = jnp.maximum(conv_taps(x_ref[...], w1_ref, b1_ref[...]), 0.0)
    h = layer_norm(h, g1_ref[...], be1_ref[...])
    # dropout: identity (eval / inference mode)

    # ---- conv_2 -> relu -> norm_2
    hm = (h * mask_col).astype(jnp.bfloat16)
    h2 = jnp.maximum(conv_taps(hm, w2_ref, b2_ref[...]), 0.0)
    h2 = layer_norm(h2, g2_ref[...], be2_ref[...])
    # dropout: identity (eval / inference mode)

    # ---- proj (1x1 conv, Cf -> 1), emitted as Bb lane-dense (1, T) rows.
    h2m = (h2 * mask_col).astype(jnp.bfloat16)                    # (Bb*T, Cf)
    rows = []
    for b in range(Bb):
        rows.append(jax.lax.dot_general(
            wp_ref[...], h2m[b * T:(b + 1) * T, :],
            dimension_numbers=(((1,), (1,)), ((), ())),
            preferred_element_type=jnp.float32))                  # (1, T)
    out = jnp.concatenate(rows, axis=0)                           # (Bb, T)
    # proj(h2*mask)*mask == wp.(h2*mask) + bp*mask  (since wp.(h2*mask) is
    # already zero at masked positions).
    o_ref[...] = out + bp_ref[...] * mr_ref[...]


def duration_predictor_pallas(x_nct, mask_n1t, params, *, kernel_size, block_b=8):
    """x_nct: (B, Cin, T) f32, mask_n1t: (B, 1, T) f32.  Returns (B, 1, T) f32."""
    B, Cin, T = x_nct.shape
    K = kernel_size
    assert K % 2 == 1, "padding=K//2 gives 'same' conv only for odd K"
    Cf = params["g1"].shape[-1]

    # Bb batch rows per grid step.  When the batch is split across steps, Bb
    # must be a multiple of 8 (sublane tile) and T a multiple of 8; otherwise
    # fall back to a single full-batch step (blocks equal to full array dims).
    if B <= block_b or T % 8 != 0:
        Bb = B
    else:
        Bb = block_b
    nb = pl.cdiv(B, Bb)
    B_pad = nb * Bb

    mask_bt = mask_n1t[:, 0, :].astype(jnp.float32)                  # (B, T)
    # Single fused wrapper pass over x: mask * transpose * cast-to-bf16
    # (halves the per-step input DMA vs f32 NCT; masking here is exact w.r.t.
    # the reference, which multiplies by x_mask before conv_1).
    xm = (jnp.transpose(x_nct, (0, 2, 1))
          * mask_bt[:, :, None]).astype(jnp.bfloat16)                # (B, T, Cin)
    if B_pad != B:
        pad = B_pad - B
        xm = jnp.pad(xm, ((0, pad), (0, 0), (0, 0)))
        mask_bt = jnp.pad(mask_bt, ((0, pad), (0, 0)))
    x2d = xm.reshape(B_pad * T, Cin)                                 # stacked rows
    mask_col = mask_bt.reshape(B_pad * T, 1)
    t_local = jnp.tile(jnp.arange(T, dtype=jnp.int32), Bb).reshape(Bb * T, 1)

    w1 = params["w1"].astype(jnp.bfloat16)                           # (K, Cin, Cf)
    w2 = params["w2"].astype(jnp.bfloat16)                           # (K, Cf, Cf)
    wp_row = params["wp"].reshape(1, Cf).astype(jnp.bfloat16)

    # Right-size the VMEM limit (v7x has 64 MiB per TC): double-buffered I/O
    # blocks + weights + headroom for the live f32 activation slabs.
    act = Bb * T * Cf * 4
    io = 2 * (Bb * T * 2 * Cin + 3 * Bb * T * 4 + Bb * T * 4)
    wb = 2 * (K * Cin * Cf + K * Cf * Cf + Cf) + 4 * (6 * Cf + 2)
    vmem_limit = int(min(max(8 * act + io + wb, 16 * 2**20), 64 * 2**20))

    kernel = functools.partial(_duration_predictor_kernel, K=K, T=T, Bb=Bb, Cf=Cf)

    def const(shape):
        return pl.BlockSpec(shape, lambda b: (0,) * len(shape))

    out = pl.pallas_call(
        kernel,
        out_shape=jax.ShapeDtypeStruct((B_pad, T), jnp.float32),
        grid=(nb,),
        in_specs=[
            pl.BlockSpec((Bb * T, Cin), lambda b: (b, 0)),   # x (stacked rows)
            pl.BlockSpec((Bb * T, 1), lambda b: (b, 0)),     # mask, column layout
            pl.BlockSpec((Bb, T), lambda b: (b, 0)),         # mask, row layout
            const((Bb * T, 1)),                              # local time index
            const((K, Cin, Cf)),
            const((1, Cf)), const((1, Cf)), const((1, Cf)),
            const((K, Cf, Cf)),
            const((1, Cf)), const((1, Cf)), const((1, Cf)),
            const((1, Cf)),
            const((1, 1)),
        ],
        out_specs=pl.BlockSpec((Bb, T), lambda b: (b, 0)),
        compiler_params=pltpu.CompilerParams(
            dimension_semantics=("parallel",),
            vmem_limit_bytes=vmem_limit),
    )(x2d, mask_col, mask_bt, t_local,
      w1, params["b1"], params["g1"], params["be1"],
      w2, params["b2"], params["g2"], params["be2"],
      wp_row, params["bp"])

    return out[:B].reshape(B, 1, T)


def duration_predictor_ref(x_nct, mask_n1t, params, *, kernel_size):
    """Pure-JAX reference mirroring the kernel's bf16-matmul / f32-accumulate."""
    K = kernel_size
    P = K // 2
    B, Cin, T = x_nct.shape

    x = jnp.transpose(x_nct, (0, 2, 1))                       # (B, T, Cin)
    m = jnp.transpose(mask_n1t, (0, 2, 1))                    # (B, T, 1)

    def conv(h_masked, w, b):                                  # h_masked: (B, T, C)
        hp = jnp.pad(h_masked, ((0, 0), (P, P), (0, 0)))
        acc = jnp.zeros((B, T, w.shape[-1]), jnp.float32)
        for k in range(K):
            acc = acc + jnp.einsum(
                "btc,cd->btd",
                hp[:, k:k + T, :].astype(jnp.bfloat16),
                w[k].astype(jnp.bfloat16),
                preferred_element_type=jnp.float32)
        return acc + b

    def lnorm(h, g, be):
        mu = jnp.mean(h, axis=-1, keepdims=True)
        var = jnp.mean((h - mu) ** 2, axis=-1, keepdims=True)
        return (h - mu) * jax.lax.rsqrt(var + EPS) * g + be

    h = jax.nn.relu(conv(x * m, params["w1"], params["b1"]))
    h = lnorm(h, params["g1"], params["be1"])
    h = jax.nn.relu(conv(h * m, params["w2"], params["b2"]))
    h = lnorm(h, params["g2"], params["be2"])
    out = jnp.einsum("btc,cd->btd",
                     (h * m).astype(jnp.bfloat16),
                     params["wp"].astype(jnp.bfloat16),
                     preferred_element_type=jnp.float32) + params["bp"]
    return jnp.transpose(out * m, (0, 2, 1))                   # (B, 1, T)


def init_params(key, in_channels, filter_channels, kernel_size):
    """Deterministic synthetic parameters.  Conv weights stored as (K, Cin, Cout)
    (i.e. PyTorch (Cout, Cin, K) transposed)."""
    ks = jax.random.split(key, 6)
    s1 = 1.0 / (in_channels * kernel_size) ** 0.5
    s2 = 1.0 / (filter_channels * kernel_size) ** 0.5
    sp = 1.0 / filter_channels ** 0.5
    return {
        "w1": jax.random.uniform(ks[0], (kernel_size, in_channels, filter_channels),
                                 jnp.float32, -s1, s1),
        "b1": jax.random.uniform(ks[1], (1, filter_channels), jnp.float32, -s1, s1),
        "g1": jnp.ones((1, filter_channels), jnp.float32),
        "be1": jnp.zeros((1, filter_channels), jnp.float32),
        "w2": jax.random.uniform(ks[2], (kernel_size, filter_channels, filter_channels),
                                 jnp.float32, -s2, s2),
        "b2": jax.random.uniform(ks[3], (1, filter_channels), jnp.float32, -s2, s2),
        "g2": jnp.ones((1, filter_channels), jnp.float32),
        "be2": jnp.zeros((1, filter_channels), jnp.float32),
        "wp": jax.random.uniform(ks[4], (filter_channels, 1), jnp.float32, -sp, sp),
        "bp": jax.random.uniform(ks[5], (1, 1), jnp.float32, -sp, sp),
    }


if __name__ == "__main__":
    master = jax.random.PRNGKey(0)

    def run_case(B, Cin, Cf, T, K, key, block_b=8):
        kx, kp, kl = jax.random.split(key, 3)
        x = jax.random.normal(kx, (B, Cin, T), jnp.float32)          # PyTorch NCT
        lengths = jax.random.randint(kl, (B,), T // 2, T + 1)
        mask = (jnp.arange(T)[None, :] < lengths[:, None]).astype(jnp.float32)
        mask = mask[:, None, :]                                      # (B, 1, T)
        params = init_params(kp, Cin, Cf, K)

        out = duration_predictor_pallas(x, mask, params, kernel_size=K,
                                        block_b=block_b)
        out = jax.block_until_ready(out)
        assert out.shape == (B, 1, T)

        ref = duration_predictor_ref(x, mask, params, kernel_size=K)
        err = float(jnp.max(jnp.abs(out - ref)))
        assert jnp.allclose(out, ref, atol=1e-2, rtol=1e-2), \
            f"mismatch vs reference (max err {err})"

    # Small demo case: B=2, Cin=8, Cf=16, T=16, K=3 (single grid step).
    run_case(2, 8, 16, 16, 3, jax.random.fold_in(master, 0))
    # Multi-step grid + batch padding path: B=9 split into Bb=8 groups.
    run_case(9, 8, 16, 16, 3, jax.random.fold_in(master, 1))

    print("KERNEL_OK")
</pallas_src>

<mosaic_0001>
module attributes {stable_mosaic.version = 11 : i64} {
  func.func @_duration_predictor_kernel(%arg0: i32, %arg1: memref<32x8xbf16, #tpu.memory_space<vmem>>, %arg2: memref<32x1xf32, #tpu.memory_space<vmem>>, %arg3: memref<2x16xf32, #tpu.memory_space<vmem>>, %arg4: memref<32x1xi32, #tpu.memory_space<vmem>>, %arg5: memref<3x8x16xbf16, #tpu.memory_space<vmem>>, %arg6: memref<1x16xf32, #tpu.memory_space<vmem>>, %arg7: memref<1x16xf32, #tpu.memory_space<vmem>>, %arg8: memref<1x16xf32, #tpu.memory_space<vmem>>, %arg9: memref<3x16x16xbf16, #tpu.memory_space<vmem>>, %arg10: memref<1x16xf32, #tpu.memory_space<vmem>>, %arg11: memref<1x16xf32, #tpu.memory_space<vmem>>, %arg12: memref<1x16xf32, #tpu.memory_space<vmem>>, %arg13: memref<1x16xbf16, #tpu.memory_space<vmem>>, %arg14: memref<1x1xf32, #tpu.memory_space<vmem>>, %arg15: memref<2x16xf32, #tpu.memory_space<vmem>>) attributes {dimension_semantics = [#tpu.dimension_semantics<parallel>], iteration_bounds = array<i64: 1>, scalar_prefetch = 0 : i64, scratch_operands = 0 : i64, tpu.core_type = #tpu.core_type<tc>, window_params = [{transform_indices = @transform_0, window_bounds = array<i64: 32, 8>}, {transform_indices = @transform_1, window_bounds = array<i64: 32, 1>}, {transform_indices = @transform_2, window_bounds = array<i64: 2, 16>}, {pipeline_mode = #tpu.pipeline_mode<synchronous>, transform_indices = @transform_3, window_bounds = array<i64: 32, 1>}, {pipeline_mode = #tpu.pipeline_mode<synchronous>, transform_indices = @transform_4, window_bounds = array<i64: 3, 8, 16>}, {pipeline_mode = #tpu.pipeline_mode<synchronous>, transform_indices = @transform_5, window_bounds = array<i64: 1, 16>}, {pipeline_mode = #tpu.pipeline_mode<synchronous>, transform_indices = @transform_6, window_bounds = array<i64: 1, 16>}, {pipeline_mode = #tpu.pipeline_mode<synchronous>, transform_indices = @transform_7, window_bounds = array<i64: 1, 16>}, {pipeline_mode = #tpu.pipeline_mode<synchronous>, transform_indices = @transform_8, window_bounds = array<i64: 3, 16, 16>}, {pipeline_mode = #tpu.pipeline_mode<synchronous>, transform_indices = @transform_9, window_bounds = array<i64: 1, 16>}, {pipeline_mode = #tpu.pipeline_mode<synchronous>, transform_indices = @transform_10, window_bounds = array<i64: 1, 16>}, {pipeline_mode = #tpu.pipeline_mode<synchronous>, transform_indices = @transform_11, window_bounds = array<i64: 1, 16>}, {pipeline_mode = #tpu.pipeline_mode<synchronous>, transform_indices = @transform_12, window_bounds = array<i64: 1, 16>}, {pipeline_mode = #tpu.pipeline_mode<synchronous>, transform_indices = @transform_13, window_bounds = array<i64: 1, 1>}, {transform_indices = @transform_14, window_bounds = array<i64: 2, 16>}]} {
    %c0 = arith.constant 0 : index
    %c0_0 = arith.constant 0 : index
    %0 = vector.load %arg2[%c0, %c0_0] : memref<32x1xf32, #tpu.memory_space<vmem>>, vector<32x1xf32>
    %c0_1 = arith.constant 0 : index
    %c0_2 = arith.constant 0 : index
    %1 = vector.load %arg4[%c0_1, %c0_2] : memref<32x1xi32, #tpu.memory_space<vmem>>, vector<32x1xi32>
    %c15_i32 = arith.constant 15 : i32
    %2 = vector.broadcast %c15_i32 : i32 to vector<32x1xi32>
    %3 = arith.cmpi slt, %1, %2 : vector<32x1xi32>
    %4 = arith.extui %3 : vector<32x1xi1> to vector<32x1xi32>
    %5 = arith.sitofp %4 : vector<32x1xi32> to vector<32x1xf32>
    %c1_i32 = arith.constant 1 : i32
    %6 = vector.broadcast %c1_i32 : i32 to vector<32x1xi32>
    %7 = arith.cmpi sge, %1, %6 : vector<32x1xi32>
    %8 = arith.extui %7 : vector<32x1xi1> to vector<32x1xi32>
    %9 = arith.sitofp %8 : vector<32x1xi32> to vector<32x1xf32>
    %c0_3 = arith.constant 0 : index
    %c0_4 = arith.constant 0 : index
    %10 = vector.load %arg1[%c0_3, %c0_4] : memref<32x8xbf16, #tpu.memory_space<vmem>>, vector<32x8xbf16>
    %c0_5 = arith.constant 0 : index
    %c0_6 = arith.constant 0 : index
    %11 = vector.load %arg6[%c0_5, %c0_6] : memref<1x16xf32, #tpu.memory_space<vmem>>, vector<1x16xf32>
    %cst = arith.constant 0.000000e+00 : f32
    %12 = vector.broadcast %cst : f32 to vector<32x16xf32>
    %c0_7 = arith.constant 0 : index
    %c0_8 = arith.constant 0 : index
    %c0_9 = arith.constant 0 : index
    %13 = vector.load %arg5[%c0_7, %c0_8, %c0_9] : memref<3x8x16xbf16, #tpu.memory_space<vmem>>, vector<1x8x16xbf16>
    %14 = vector.shape_cast %13 : vector<1x8x16xbf16> to vector<8x16xbf16>
    %cst_10 = arith.constant dense<0.000000e+00> : vector<32x16xf32>
    %15 = tpu.matmul %10, %14, %cst_10 {dimension_numbers = #tpu.dot_dimension_numbers<[1], [0], [0], [1], [0, 0, 1, 1], [], []>} : vector<32x8xbf16>, vector<8x16xbf16>, vector<32x16xf32> -> vector<32x16xf32>
    %c1_i32_11 = arith.constant 1 : i32
    %16 = tpu.dynamic_rotate %15 by %c1_i32_11 dim 0 : vector<32x16xf32>, i32 -> vector<32x16xf32>
    %17 = vector.broadcast %9 : vector<32x1xf32> to vector<32x16xf32>
    %18 = arith.mulf %16, %17 : vector<32x16xf32>
    %19 = arith.addf %12, %18 : vector<32x16xf32>
    %c1 = arith.constant 1 : index
    %c0_12 = arith.constant 0 : index
    %c0_13 = arith.constant 0 : index
    %20 = vector.load %arg5[%c1, %c0_12, %c0_13] : memref<3x8x16xbf16, #tpu.memory_space<vmem>>, vector<1x8x16xbf16>
    %21 = vector.shape_cast %20 : vector<1x8x16xbf16> to vector<8x16xbf16>
    %cst_14 = arith.constant dense<0.000000e+00> : vector<32x16xf32>
    %22 = tpu.matmul %10, %21, %cst_14 {dimension_numbers = #tpu.dot_dimension_numbers<[1], [0], [0], [1], [0, 0, 1, 1], [], []>} : vector<32x8xbf16>, vector<8x16xbf16>, vector<32x16xf32> -> vector<32x16xf32>
    %23 = arith.addf %19, %22 : vector<32x16xf32>
    %c2 = arith.constant 2 : index
    %c0_15 = arith.constant 0 : index
    %c0_16 = arith.constant 0 : index
    %24 = vector.load %arg5[%c2, %c0_15, %c0_16] : memref<3x8x16xbf16, #tpu.memory_space<vmem>>, vector<1x8x16xbf16>
    %25 = vector.shape_cast %24 : vector<1x8x16xbf16> to vector<8x16xbf16>
    %cst_17 = arith.constant dense<0.000000e+00> : vector<32x16xf32>
    %26 = tpu.matmul %10, %25, %cst_17 {dimension_numbers = #tpu.dot_dimension_numbers<[1], [0], [0], [1], [0, 0, 1, 1], [], []>} : vector<32x8xbf16>, vector<8x16xbf16>, vector<32x16xf32> -> vector<32x16xf32>
    %c31_i32 = arith.constant 31 : i32
    %27 = tpu.dynamic_rotate %26 by %c31_i32 dim 0 : vector<32x16xf32>, i32 -> vector<32x16xf32>
    %28 = vector.broadcast %5 : vector<32x1xf32> to vector<32x16xf32>
    %29 = arith.mulf %27, %28 : vector<32x16xf32>
    %30 = arith.addf %23, %29 : vector<32x16xf32>
    %31 = vector.broadcast %11 : vector<1x16xf32> to vector<32x16xf32>
    %32 = arith.addf %30, %31 : vector<32x16xf32>
    %cst_18 = arith.constant 0.000000e+00 : f32
    %33 = vector.broadcast %cst_18 : f32 to vector<32x16xf32>
    %34 = arith.maximumf %32, %33 : vector<32x16xf32>
    %c0_19 = arith.constant 0 : index
    %c0_20 = arith.constant 0 : index
    %35 = vector.load %arg7[%c0_19, %c0_20] : memref<1x16xf32, #tpu.memory_space<vmem>>, vector<1x16xf32>
    %c0_21 = arith.constant 0 : index
    %c0_22 = arith.constant 0 : index
    %36 = vector.load %arg8[%c0_21, %c0_22] : memref<1x16xf32, #tpu.memory_space<vmem>>, vector<1x16xf32>
    %cst_23 = arith.constant dense<0.000000e+00> : vector<32xf32>
    %37 = vector.multi_reduction <add>, %34, %cst_23 [1] : vector<32x16xf32> to vector<32xf32>
    %38 = vector.shape_cast %37 : vector<32xf32> to vector<32x1xf32>
    %39 = arith.mulf %34, %34 : vector<32x16xf32>
    %cst_24 = arith.constant dense<0.000000e+00> : vector<32xf32>
    %40 = vector.multi_reduction <add>, %39, %cst_24 [1] : vector<32x16xf32> to vector<32xf32>
    %41 = vector.shape_cast %40 : vector<32xf32> to vector<32x1xf32>
    %cst_25 = arith.constant 6.250000e-02 : f32
    %42 = vector.broadcast %cst_25 : f32 to vector<32x1xf32>
    %43 = arith.mulf %38, %42 : vector<32x1xf32>
    %cst_26 = arith.constant 6.250000e-02 : f32
    %44 = vector.broadcast %cst_26 : f32 to vector<32x1xf32>
    %45 = arith.mulf %41, %44 : vector<32x1xf32>
    %46 = arith.mulf %43, %43 : vector<32x1xf32>
    %47 = arith.subf %45, %46 : vector<32x1xf32>
    %48 = vector.broadcast %43 : vector<32x1xf32> to vector<32x16xf32>
    %49 = arith.subf %34, %48 : vector<32x16xf32>
    %cst_27 = arith.constant 9.99999974E-5 : f32
    %50 = vector.broadcast %cst_27 : f32 to vector<32x1xf32>
    %51 = arith.addf %47, %50 : vector<32x1xf32>
    %52 = math.rsqrt %51 : vector<32x1xf32>
    %53 = vector.broadcast %52 : vector<32x1xf32> to vector<32x16xf32>
    %54 = arith.mulf %49, %53 : vector<32x16xf32>
    %55 = vector.broadcast %35 : vector<1x16xf32> to vector<32x16xf32>
    %56 = arith.mulf %54, %55 : vector<32x16xf32>
    %57 = vector.broadcast %36 : vector<1x16xf32> to vector<32x16xf32>
    %58 = arith.addf %56, %57 : vector<32x16xf32>
    %59 = vector.broadcast %0 : vector<32x1xf32> to vector<32x16xf32>
    %60 = arith.mulf %58, %59 : vector<32x16xf32>
    %61 = arith.truncf %60 : vector<32x16xf32> to vector<32x16xbf16>
    %c0_28 = arith.constant 0 : index
    %c0_29 = arith.constant 0 : index
    %62 = vector.load %arg10[%c0_28, %c0_29] : memref<1x16xf32, #tpu.memory_space<vmem>>, vector<1x16xf32>
    %cst_30 = arith.constant 0.000000e+00 : f32
    %63 = vector.broadcast %cst_30 : f32 to vector<32x16xf32>
    %c0_31 = arith.constant 0 : index
    %c0_32 = arith.constant 0 : index
    %c0_33 = arith.constant 0 : index
    %64 = vector.load %arg9[%c0_31, %c0_32, %c0_33] : memref<3x16x16xbf16, #tpu.memory_space<vmem>>, vector<1x16x16xbf16>
    %65 = vector.shape_cast %64 : vector<1x16x16xbf16> to vector<16x16xbf16>
    %cst_34 = arith.constant dense<0.000000e+00> : vector<32x16xf32>
    %66 = tpu.matmul %61, %65, %cst_34 {dimension_numbers = #tpu.dot_dimension_numbers<[1], [0], [0], [1], [0, 0, 1, 1], [], []>} : vector<32x16xbf16>, vector<16x16xbf16>, vector<32x16xf32> -> vector<32x16xf32>
    %c1_i32_35 = arith.constant 1 : i32
    %67 = tpu.dynamic_rotate %66 by %c1_i32_35 dim 0 : vector<32x16xf32>, i32 -> vector<32x16xf32>
    %68 = vector.broadcast %9 : vector<32x1xf32> to vector<32x16xf32>
    %69 = arith.mulf %67, %68 : vector<32x16xf32>
    %70 = arith.addf %63, %69 : vector<32x16xf32>
    %c1_36 = arith.constant 1 : index
    %c0_37 = arith.constant 0 : index
    %c0_38 = arith.constant 0 : index
    %71 = vector.load %arg9[%c1_36, %c0_37, %c0_38] : memref<3x16x16xbf16, #tpu.memory_space<vmem>>, vector<1x16x16xbf16>
    %72 = vector.shape_cast %71 : vector<1x16x16xbf16> to vector<16x16xbf16>
    %cst_39 = arith.constant dense<0.000000e+00> : vector<32x16xf32>
    %73 = tpu.matmul %61, %72, %cst_39 {dimension_numbers = #tpu.dot_dimension_numbers<[1], [0], [0], [1], [0, 0, 1, 1], [], []>} : vector<32x16xbf16>, vector<16x16xbf16>, vector<32x16xf32> -> vector<32x16xf32>
    %74 = arith.addf %70, %73 : vector<32x16xf32>
    %c2_40 = arith.constant 2 : index
    %c0_41 = arith.constant 0 : index
    %c0_42 = arith.constant 0 : index
    %75 = vector.load %arg9[%c2_40, %c0_41, %c0_42] : memref<3x16x16xbf16, #tpu.memory_space<vmem>>, vector<1x16x16xbf16>
    %76 = vector.shape_cast %75 : vector<1x16x16xbf16> to vector<16x16xbf16>
    %cst_43 = arith.constant dense<0.000000e+00> : vector<32x16xf32>
    %77 = tpu.matmul %61, %76, %cst_43 {dimension_numbers = #tpu.dot_dimension_numbers<[1], [0], [0], [1], [0, 0, 1, 1], [], []>} : vector<32x16xbf16>, vector<16x16xbf16>, vector<32x16xf32> -> vector<32x16xf32>
    %c31_i32_44 = arith.constant 31 : i32
    %78 = tpu.dynamic_rotate %77 by %c31_i32_44 dim 0 : vector<32x16xf32>, i32 -> vector<32x16xf32>
    %79 = vector.broadcast %5 : vector<32x1xf32> to vector<32x16xf32>
    %80 = arith.mulf %78, %79 : vector<32x16xf32>
    %81 = arith.addf %74, %80 : vector<32x16xf32>
    %82 = vector.broadcast %62 : vector<1x16xf32> to vector<32x16xf32>
    %83 = arith.addf %81, %82 : vector<32x16xf32>
    %cst_45 = arith.constant 0.000000e+00 : f32
    %84 = vector.broadcast %cst_45 : f32 to vector<32x16xf32>
    %85 = arith.maximumf %83, %84 : vector<32x16xf32>
    %c0_46 = arith.constant 0 : index
    %c0_47 = arith.constant 0 : index
    %86 = vector.load %arg11[%c0_46, %c0_47] : memref<1x16xf32, #tpu.memory_space<vmem>>, vector<1x16xf32>
    %c0_48 = arith.constant 0 : index
    %c0_49 = arith.constant 0 : index
    %87 = vector.load %arg12[%c0_48, %c0_49] : memref<1x16xf32, #tpu.memory_space<vmem>>, vector<1x16xf32>
    %cst_50 = arith.constant dense<0.000000e+00> : vector<32xf32>
    %88 = vector.multi_reduction <add>, %85, %cst_50 [1] : vector<32x16xf32> to vector<32xf32>
    %89 = vector.shape_cast %88 : vector<32xf32> to vector<32x1xf32>
    %90 = arith.mulf %85, %85 : vector<32x16xf32>
    %cst_51 = arith.constant dense<0.000000e+00> : vector<32xf32>
    %91 = vector.multi_reduction <add>, %90, %cst_51 [1] : vector<32x16xf32> to vector<32xf32>
    %92 = vector.shape_cast %91 : vector<32xf32> to vector<32x1xf32>
    %cst_52 = arith.constant 6.250000e-02 : f32
    %93 = vector.broadcast %cst_52 : f32 to vector<32x1xf32>
    %94 = arith.mulf %89, %93 : vector<32x1xf32>
    %cst_53 = arith.constant 6.250000e-02 : f32
    %95 = vector.broadcast %cst_53 : f32 to vector<32x1xf32>
    %96 = arith.mulf %92, %95 : vector<32x1xf32>
    %97 = arith.mulf %94, %94 : vector<32x1xf32>
    %98 = arith.subf %96, %97 : vector<32x1xf32>
    %99 = vector.broadcast %94 : vector<32x1xf32> to vector<32x16xf32>
    %100 = arith.subf %85, %99 : vector<32x16xf32>
    %cst_54 = arith.constant 9.99999974E-5 : f32
    %101 = vector.broadcast %cst_54 : f32 to vector<32x1xf32>
    %102 = arith.addf %98, %101 : vector<32x1xf32>
    %103 = math.rsqrt %102 : vector<32x1xf32>
    %104 = vector.broadcast %103 : vector<32x1xf32> to vector<32x16xf32>
    %105 = arith.mulf %100, %104 : vector<32x16xf32>
    %106 = vector.broadcast %86 : vector<1x16xf32> to vector<32x16xf32>
    %107 = arith.mulf %105, %106 : vector<32x16xf32>
    %108 = vector.broadcast %87 : vector<1x16xf32> to vector<32x16xf32>
    %109 = arith.addf %107, %108 : vector<32x16xf32>
    %110 = vector.broadcast %0 : vector<32x1xf32> to vector<32x16xf32>
    %111 = arith.mulf %109, %110 : vector<32x16xf32>
    %112 = arith.truncf %111 : vector<32x16xf32> to vector<32x16xbf16>
    %c0_55 = arith.constant 0 : index
    %c0_56 = arith.constant 0 : index
    %113 = vector.load %arg13[%c0_55, %c0_56] : memref<1x16xbf16, #tpu.memory_space<vmem>>, vector<1x16xbf16>
    %114 = vector.extract_strided_slice %112 {offsets = [0, 0], sizes = [16, 16], strides = [1, 1]} : vector<32x16xbf16> to vector<16x16xbf16>
    %cst_57 = arith.constant dense<0.000000e+00> : vector<1x16xf32>
    %115 = tpu.matmul %113, %114, %cst_57 {dimension_numbers = #tpu.dot_dimension_numbers<[1], [1], [0], [0], [0, 0, 1, 0], [], []>} : vector<1x16xbf16>, vector<16x16xbf16>, vector<1x16xf32> -> vector<1x16xf32>
    %c0_58 = arith.constant 0 : index
    %c0_59 = arith.constant 0 : index
    %116 = vector.load %arg13[%c0_58, %c0_59] : memref<1x16xbf16, #tpu.memory_space<vmem>>, vector<1x16xbf16>
    %117 = vector.extract_strided_slice %112 {offsets = [16, 0], sizes = [16, 16], strides = [1, 1]} : vector<32x16xbf16> to vector<16x16xbf16>
    %cst_60 = arith.constant dense<0.000000e+00> : vector<1x16xf32>
    %118 = tpu.matmul %116, %117, %cst_60 {dimension_numbers = #tpu.dot_dimension_numbers<[1], [1], [0], [0], [0, 0, 1, 0], [], []>} : vector<1x16xbf16>, vector<16x16xbf16>, vector<1x16xf32> -> vector<1x16xf32>
    %119 = tpu.concatenate %115, %118 in 0 : vector<1x16xf32>, vector<1x16xf32> -> vector<2x16xf32>
    %c0_61 = arith.constant 0 : index
    %c0_62 = arith.constant 0 : index
    %120 = vector.load %arg14[%c0_61, %c0_62] : memref<1x1xf32, #tpu.memory_space<vmem>>, vector<1x1xf32>
    %c0_63 = arith.constant 0 : index
    %c0_64 = arith.constant 0 : index
    %121 = vector.load %arg3[%c0_63, %c0_64] : memref<2x16xf32, #tpu.memory_space<vmem>>, vector<2x16xf32>
    %122 = vector.broadcast %120 : vector<1x1xf32> to vector<2x16xf32>
    %123 = arith.mulf %122, %121 : vector<2x16xf32>
    %124 = arith.addf %119, %123 : vector<2x16xf32>
    %c0_65 = arith.constant 0 : index
    %c0_66 = arith.constant 0 : index
    %125 = vector.load %arg15[%c0_65, %c0_66] : memref<2x16xf32, #tpu.memory_space<vmem>>, vector<2x16xf32>
    tpu.vector_store %arg15[%c0_65, %c0_66], %124 {strides = array<i32>} : memref<2x16xf32, #tpu.memory_space<vmem>>, vector<2x16xf32>,
    return
  }
  func.func @transform_0(%arg0: i32) -> (i32, i32) {
    %c0_i32 = arith.constant 0 : i32
    %c0_i32_0 = arith.constant 0 : i32
    return %arg0, %c0_i32 : i32, i32
  }
  func.func @transform_1(%arg0: i32) -> (i32, i32) {
    %c0_i32 = arith.constant 0 : i32
    %c0_i32_0 = arith.constant 0 : i32
    return %arg0, %c0_i32 : i32, i32
  }
  func.func @transform_2(%arg0: i32) -> (i32, i32) {
    %c0_i32 = arith.constant 0 : i32
    %c0_i32_0 = arith.constant 0 : i32
    return %arg0, %c0_i32 : i32, i32
  }
  func.func @transform_3(%arg0: i32) -> (i32, i32) {
    %c0_i32 = arith.constant 0 : i32
    %c0_i32_0 = arith.constant 0 : i32
    %c0_i32_1 = arith.constant 0 : i32
    return %c0_i32, %c0_i32_0 : i32, i32
  }
  func.func @transform_4(%arg0: i32) -> (i32, i32, i32) {
    %c0_i32 = arith.constant 0 : i32
    %c0_i32_0 = arith.constant 0 : i32
    %c0_i32_1 = arith.constant 0 : i32
    %c0_i32_2 = arith.constant 0 : i32
    return %c0_i32, %c0_i32_0, %c0_i32_1 : i32, i32, i32
  }
  func.func @transform_5(%arg0: i32) -> (i32, i32) {
    %c0_i32 = arith.constant 0 : i32
    %c0_i32_0 = arith.constant 0 : i32
    %c0_i32_1 = arith.constant 0 : i32
    return %c0_i32, %c0_i32_0 : i32, i32
  }
  func.func @transform_6(%arg0: i32) -> (i32, i32) {
    %c0_i32 = arith.constant 0 : i32
    %c0_i32_0 = arith.constant 0 : i32
    %c0_i32_1 = arith.constant 0 : i32
    return %c0_i32, %c0_i32_0 : i32, i32
  }
  func.func @transform_7(%arg0: i32) -> (i32, i32) {
    %c0_i32 = arith.constant 0 : i32
    %c0_i32_0 = arith.constant 0 : i32
    %c0_i32_1 = arith.constant 0 : i32
    return %c0_i32, %c0_i32_0 : i32, i32
  }
  func.func @transform_8(%arg0: i32) -> (i32, i32, i32) {
    %c0_i32 = arith.constant 0 : i32
    %c0_i32_0 = arith.constant 0 : i32
    %c0_i32_1 = arith.constant 0 : i32
    %c0_i32_2 = arith.constant 0 : i32
    return %c0_i32, %c0_i32_0, %c0_i32_1 : i32, i32, i32
  }
  func.func @transform_9(%arg0: i32) -> (i32, i32) {
    %c0_i32 = arith.constant 0 : i32
    %c0_i32_0 = arith.constant 0 : i32
    %c0_i32_1 = arith.constant 0 : i32
    return %c0_i32, %c0_i32_0 : i32, i32
  }
  func.func @transform_10(%arg0: i32) -> (i32, i32) {
    %c0_i32 = arith.constant 0 : i32
    %c0_i32_0 = arith.constant 0 : i32
    %c0_i32_1 = arith.constant 0 : i32
    return %c0_i32, %c0_i32_0 : i32, i32
  }
  func.func @transform_11(%arg0: i32) -> (i32, i32) {
    %c0_i32 = arith.constant 0 : i32
    %c0_i32_0 = arith.constant 0 : i32
    %c0_i32_1 = arith.constant 0 : i32
    return %c0_i32, %c0_i32_0 : i32, i32
  }
  func.func @transform_12(%arg0: i32) -> (i32, i32) {
    %c0_i32 = arith.constant 0 : i32
    %c0_i32_0 = arith.constant 0 : i32
    %c0_i32_1 = arith.constant 0 : i32
    return %c0_i32, %c0_i32_0 : i32, i32
  }
  func.func @transform_13(%arg0: i32) -> (i32, i32) {
    %c0_i32 = arith.constant 0 : i32
    %c0_i32_0 = arith.constant 0 : i32
    %c0_i32_1 = arith.constant 0 : i32
    return %c0_i32, %c0_i32_0 : i32, i32
  }
  func.func @transform_14(%arg0: i32) -> (i32, i32) {
    %c0_i32 = arith.constant 0 : i32
    %c0_i32_0 = arith.constant 0 : i32
    return %arg0, %c0_i32 : i32, i32
  }
}

</mosaic_0001>

<llo_original>
// kernel: tpu_custom_call.1
$region0: #{tpu_custom_call.1}
  #allocation0 [shape = 'u32[]', space=smem, size = 0x4, offset = 0x4, fixed_abs, tag = 'smem constant byte address 0x4 - core index']
  #allocation1 [shape = 'u32[144,128]{1,0:T(1,128)}', space=vmem, size = 0x12000, scoped, tag = 'internal scratch']
  #allocation2 [shape = 'f32[1,1]{1,0:T(1,128)S(1)}', space=vmem, size = 0x200, scoped, tag = 'scoped memory for tpu_custom_call.1']
  %s0 = inlined_call_operand.vmem [shape: bf16[32,8], index: 0, kind: input, shape index: {}]
  %s1 = inlined_call_operand.vmem [shape: f32[32,1], index: 1, kind: input, shape index: {}]
  %s2 = inlined_call_operand.vmem [shape: f32[2,16], index: 2, kind: input, shape index: {}]
  %s3 = inlined_call_operand.vmem [shape: s32[32,1], index: 3, kind: input, shape index: {}]
  %s4 = inlined_call_operand.vmem [shape: bf16[3,8,16], index: 4, kind: input, shape index: {}]
  %s5 = inlined_call_operand.vmem [shape: f32[1,16], index: 5, kind: input, shape index: {}]
  %s6 = inlined_call_operand.vmem [shape: f32[1,16], index: 6, kind: input, shape index: {}]
  %s7 = inlined_call_operand.vmem [shape: f32[1,16], index: 7, kind: input, shape index: {}]
  %s8 = inlined_call_operand.vmem [shape: bf16[3,16,16], index: 8, kind: input, shape index: {}]
  %s9 = inlined_call_operand.vmem [shape: f32[1,16], index: 9, kind: input, shape index: {}]
  %s10 = inlined_call_operand.vmem [shape: f32[1,16], index: 10, kind: input, shape index: {}]
  %s11 = inlined_call_operand.vmem [shape: f32[1,16], index: 11, kind: input, shape index: {}]
  %s12 = inlined_call_operand.vmem [shape: bf16[1,16], index: 12, kind: input, shape index: {}]
  %s13 = inlined_call_operand.<no memory space> [shape: f32[1,1], index: 13, kind: input, shape index: {}]
  %s14 = inlined_call_operand.hbm [shape: f32[2,16], index: 14, kind: output, shape index: {}]
  %s15 = sld [smem:[#allocation0]]
  $region66: #{tpu_custom_call.1} parent=0
    _
  %s17 = ssub.s32 1, %s15
  %s18 = scalar_select 0, %s17, %s15
  %v19 = vstv %s13
  %20 = vst [vmem:[#allocation2] sm:$0x1] %v19
  $region1: #{tpu_custom_call.1} parent=0
    #allocation3 [shape = 'u8[1024]{0}', space=vmem, size = 0x400, scoped, tag = 'output window, operand 0, single buffered']
    #allocation4 [shape = 's32[1]{0}', space=sflag, size = 0x4, scoped, tag = 'scoped memory for tpu_custom_call.1']
    %21 = vsyncpa [#allocation4], 0
    // Predicated region
    $region2: #{tpu_custom_call.1} parent=1 // pred_check
      _
    $region3: #{tpu_custom_call.1} parent=1 // pred_check_branch
      %23 = sbr.rel (0) target = $region5
    $region4: #{tpu_custom_call.1} parent=1 // pred_region
      _
    $region5: #{tpu_custom_call.1} parent=1 // pred_fallthru
      _
    // Predicated region
    $region6: #{tpu_custom_call.1} parent=1 // pred_check
      _
    $region7: #{tpu_custom_call.1} parent=1 // pred_check_branch
      %25 = sbr.rel (0) target = $region9
    $region8: #{tpu_custom_call.1} parent=1 // pred_region
      _
    $region9: #{tpu_custom_call.1} parent=1 // pred_fallthru
      _
    // Predicated region
    $region10: #{tpu_custom_call.1} parent=1 // pred_check
      _
    $region11: #{tpu_custom_call.1} parent=1 // pred_check_branch
      %27 = sbr.rel (0) target = $region13
    $region12: #{tpu_custom_call.1} parent=1 // pred_region
      _
    $region13: #{tpu_custom_call.1} parent=1 // pred_fallthru
      _
    // Predicated region
    $region14: #{tpu_custom_call.1} parent=1 // pred_check
      _
    $region15: #{tpu_custom_call.1} parent=1 // pred_check_branch
      %29 = sbr.rel (0) target = $region17
    $region16: #{tpu_custom_call.1} parent=1 // pred_region
      _
    $region17: #{tpu_custom_call.1} parent=1 // pred_fallthru
      _
    // Predicated region
    $region18: #{tpu_custom_call.1} parent=1 // pred_check
      _
    $region19: #{tpu_custom_call.1} parent=1 // pred_check_branch
      %31 = sbr.rel (0) target = $region21
    $region20: #{tpu_custom_call.1} parent=1 // pred_region
      _
    $region21: #{tpu_custom_call.1} parent=1 // pred_fallthru
      _
    // Predicated region
    $region22: #{tpu_custom_call.1} parent=1 // pred_check
      _
    $region23: #{tpu_custom_call.1} parent=1 // pred_check_branch
      %33 = sbr.rel (0) target = $region25
    $region24: #{tpu_custom_call.1} parent=1 // pred_region
      _
    $region25: #{tpu_custom_call.1} parent=1 // pred_fallthru
      _
    // Predicated region
    $region26: #{tpu_custom_call.1} parent=1 // pred_check
      _
    $region27: #{tpu_custom_call.1} parent=1 // pred_check_branch
      %35 = sbr.rel (0) target = $region29
    $region28: #{tpu_custom_call.1} parent=1 // pred_region
      _
    $region29: #{tpu_custom_call.1} parent=1 // pred_fallthru
      _
    // Predicated region
    $region30: #{tpu_custom_call.1} parent=1 // pred_check
      _
    $region31: #{tpu_custom_call.1} parent=1 // pred_check_branch
      %37 = sbr.rel (0) target = $region33
    $region32: #{tpu_custom_call.1} parent=1 // pred_region
      _
    $region33: #{tpu_custom_call.1} parent=1 // pred_fallthru
      _
    // Predicated region
    $region34: #{tpu_custom_call.1} parent=1 // pred_check
      _
    $region35: #{tpu_custom_call.1} parent=1 // pred_check_branch
      %39 = sbr.rel (0) target = $region37
    $region36: #{tpu_custom_call.1} parent=1 // pred_region
      _
    $region37: #{tpu_custom_call.1} parent=1 // pred_fallthru
      _
    // Predicated region
    $region38: #{tpu_custom_call.1} parent=1 // pred_check
      _
    $region39: #{tpu_custom_call.1} parent=1 // pred_check_branch
      %41 = sbr.rel (0) target = $region41
    $region40: #{tpu_custom_call.1} parent=1 // pred_region
      _
    $region41: #{tpu_custom_call.1} parent=1 // pred_fallthru
      _
    // Predicated region
    $region42: #{tpu_custom_call.1} parent=1 // pred_check
      _
    $region43: #{tpu_custom_call.1} parent=1 // pred_check_branch
      %43 = sbr.rel (0) target = $region45
    $region44: #{tpu_custom_call.1} parent=1 // pred_region
      _
    $region45: #{tpu_custom_call.1} parent=1 // pred_fallthru
      _
    // Predicated region
    $region46: #{tpu_custom_call.1} parent=1 // pred_check
      _
    $region47: #{tpu_custom_call.1} parent=1 // pred_check_branch
      %45 = sbr.rel (0) target = $region49
    $region48: #{tpu_custom_call.1} parent=1 // pred_region
      _
    $region49: #{tpu_custom_call.1} parent=1 // pred_fallthru
      _
    // Predicated region
    $region50: #{tpu_custom_call.1} parent=1 // pred_check
      _
    $region51: #{tpu_custom_call.1} parent=1 // pred_check_branch
      %47 = sbr.rel (0) target = $region53
    $region52: #{tpu_custom_call.1} parent=1 // pred_region
      _
    $region53: #{tpu_custom_call.1} parent=1 // pred_fallthru
      _
    // Predicated region
    $region54: #{tpu_custom_call.1} parent=1 // pred_check
      _
    $region55: #{tpu_custom_call.1} parent=1 // pred_check_branch
      %49 = sbr.rel (0) target = $region57
    $region56: #{tpu_custom_call.1} parent=1 // pred_region
      _
    $region57: #{tpu_custom_call.1} parent=1 // pred_fallthru
      _
    %v51 = vld [vmem:[%s1] sm:$0xff]
    %v52 = vld [vmem:[%s1 + $0x8] sm:$0xff]
    %v53 = vld [vmem:[%s1 + $0x10] sm:$0xff]
    %v54 = vld [vmem:[%s1 + $0x18] sm:$0xff]
    %v55 = vld [vmem:[%s3] sm:$0xff]
    %v56 = vld [vmem:[%s3 + $0x8] sm:$0xff]
    %v57 = vld [vmem:[%s3 + $0x10] sm:$0xff]
    %v58 = vld [vmem:[%s3 + $0x18] sm:$0xff]
    %vm59 = vcmp.lt.s32.totalorder %v55, 15
    %vm60 = vcmp.lt.s32.totalorder %v56, 15
    %vm61 = vcmp.lt.s32.totalorder %v57, 15
    %vm62 = vcmp.lt.s32.totalorder %v58, 15
    %v63 = vsel %vm59, 1, 0
    %v64 = vsel %vm60, 1, 0
    %v65 = vsel %vm61, 1, 0
    %v66 = vsel %vm62, 1, 0
    %v67 = vcvt.s32.f32 %v63
    %v68 = vcvt.s32.f32 %v64
    %v69 = vcvt.s32.f32 %v65
    %v70 = vcvt.s32.f32 %v66
    %vm71 = vcmp.ge.s32.totalorder %v55, 1
    %vm72 = vcmp.ge.s32.totalorder %v56, 1
    %vm73 = vcmp.ge.s32.totalorder %v57, 1
    %vm74 = vcmp.ge.s32.totalorder %v58, 1
    %v75 = vsel %vm71, 1, 0
    %v76 = vsel %vm72, 1, 0
    %v77 = vsel %vm73, 1, 0
    %v78 = vsel %vm74, 1, 0
    %v79 = vcvt.s32.f32 %v75
    %v80 = vcvt.s32.f32 %v76
    %v81 = vcvt.s32.f32 %v77
    %v82 = vcvt.s32.f32 %v78
    %v83 = vld [vmem:[%s0] sm:$0xf]
    %v84 = vld [vmem:[%s0 + $0x4] sm:$0xf]
    %v85 = vld [vmem:[%s0 + $0x8] sm:$0xf]
    %v86 = vld [vmem:[%s0 + $0xc] sm:$0xf]
    %v87 = vld [vmem:[%s5] sm:$0x1]
    %v88 = vld [vmem:[%s4] sm:$0xf]
    %v93 = vunpack.c.l.b16 %v83
    %v94 = vunpack.c.l.b16 %v84
    %v95 = vunpack.c.l.b16 %v85
    %v96 = vunpack.c.l.b16 %v86
    %v97 = vpack.c.b16 %v94, %v93
    %v98 = vpack.c.b16 %v96, %v95
    %vm99 = vcmask 64512
    %v101 = vsel %vm99, %v97, 0
    %v104 = vsel %vm99, %v98, 0
    %vm106 = vcmask 1043456
    %v108 = vsel %vm106, %v88, 0
    %110 = vmatprep.subr.bf16.mxu0 0
    %111 = vmatpush1.bf16.msra.mxu0 %v108
    %112 = vmatprep.subr.bf16.mxu0 0
    %113 = vmatpush1.bf16.msra.mxu0 0
    %114 = vmatprep.subr.bf16.mxu0 0
    %115 = vmatpush1.bf16.msra.mxu0 0
    %116 = vmatprep.subr.bf16.mxu0 0
    %117 = vmatpush1.bf16.msra.mxu0 0
    %118 = vmatprep.subr.bf16.mxu0 0
    %119 = vmatpush1.bf16.msra.mxu0 0
    %120 = vmatprep.subr.bf16.mxu0 0
    %121 = vmatpush1.bf16.msra.mxu0 0
    %122 = vmatprep.subr.bf16.mxu0 0
    %123 = vmatpush1.bf16.msra.mxu0 0
    %124 = vmatprep.subr.bf16.mxu0 0
    %125 = vmatpush1.bf16.msra.mxu0 0
    %126 = vmatprep.subr.bf16.mxu0 0
    %127 = vmatpush1.bf16.msra.mxu0 0
    %128 = vmatprep.subr.bf16.mxu0 0
    %129 = vmatpush1.bf16.msra.mxu0 0
    %130 = vmatprep.subr.bf16.mxu0 0
    %131 = vmatpush1.bf16.msra.mxu0 0
    %132 = vmatprep.subr.bf16.mxu0 0
    %133 = vmatpush1.bf16.msra.mxu0 0
    %134 = vmatprep.subr.bf16.mxu0 0
    %135 = vmatpush1.bf16.msra.mxu0 0
    %136 = vmatprep.subr.bf16.mxu0 0
    %137 = vmatpush1.bf16.msra.mxu0 0
    %138 = vmatprep.subr.bf16.mxu0 0
    %139 = vmatpush1.bf16.msra.mxu0 0
    %140 = vmatprep.subr.bf16.mxu0 0
    %141 = vmatpush1.bf16.msra.mxu0 0
    %142 = vmatprep.mubr.bf16.mxu0 0
    %143 = vmatmul.mubr.bf16.gmra.mrb[0].mxu0 %v101
    %v144 = vpop.f32.mrb[0].mxu0
    %v145 = vadd.f32 0.0, %v144
    %v146 = vpop.f32.mrb[0].mxu0
    %v147 = vpop.f32.mrb[0].mxu0
    %v148 = vadd.f32 0.0, %v147
    %v149 = vpop.f32.mrb[0].mxu0
    %150 = vmatprep.mubr.bf16.mxu0 0
    %151 = vmatmul.mubr.bf16.gmra.mrb[0].mxu0 %v104
    %v152 = vpop.f32.mrb[0].mxu0
    %v153 = vadd.f32 0.0, %v152
    %v154 = vpop.f32.mrb[0].mxu0
    %v155 = vpop.f32.mrb[0].mxu0
    %v156 = vadd.f32 0.0, %v155
    %v157 = vpop.f32.mrb[0].mxu0
    %158 = vdwg.mxu0
    %v159 = vrot.slane %v145, 7
    %v160 = vrot.slane %v148, 7
    %v161 = vrot.slane %v153, 7
    %v162 = vrot.slane %v156, 7
    %v163 = vlaneseq
    %v164 = vshrl.u32 %v163, 7
    %vm165 = vcmp.lt.s32.totalorder %v164, 1
    %v166 = vsel %vm165, %v161, %v162
    %v167 = vsel %vm165, %v160, %v161
    %v168 = vsel %vm165, %v159, %v160
    %v169 = vsel %vm165, %v162, %v159
    %171 = vset.pattern.permute.xlu0 0
    %172 = vperm.xlu0 %171, %v79
    %v173 = vpop.permute.xlu0 %172
    %176 = vset.pattern.permute.xlu0 0
    %177 = vperm.xlu0 %176, %v80
    %v178 = vpop.permute.xlu0 %177
    %181 = vset.pattern.permute.xlu0 0
    %182 = vperm.xlu0 %181, %v81
    %v183 = vpop.permute.xlu0 %182
    %186 = vset.pattern.permute.xlu0 0
    %187 = vperm.xlu0 %186, %v82
    %v188 = vpop.permute.xlu0 %187
    %v190 = vmul.f32 %v169, %v173
    %v191 = vmul.f32 %v168, %v178
    %v192 = vmul.f32 %v167, %v183
    %v193 = vmul.f32 %v166, %v188
    %v194 = vadd.f32 %v190, 0.0
    %v195 = vadd.f32 %v191, 0.0
    %v196 = vadd.f32 %v192, 0.0
    %v197 = vadd.f32 %v193, 0.0
    %s198 = scalar_lea.vmem %s4, 4
    %v199 = vld [vmem:[%s198] sm:$0xf]
    %v201 = vsel %vm106, %v199, 0
    %203 = vmatprep.subr.bf16.mxu0 0
    %204 = vmatpush1.bf16.msra.mxu0 %v201
    %205 = vmatprep.subr.bf16.mxu0 0
    %206 = vmatpush1.bf16.msra.mxu0 0
    %207 = vmatprep.subr.bf16.mxu0 0
    %208 = vmatpush1.bf16.msra.mxu0 0
    %209 = vmatprep.subr.bf16.mxu0 0
    %210 = vmatpush1.bf16.msra.mxu0 0
    %211 = vmatprep.subr.bf16.mxu0 0
    %212 = vmatpush1.bf16.msra.mxu0 0
    %213 = vmatprep.subr.bf16.mxu0 0
    %214 = vmatpush1.bf16.msra.mxu0 0
    %215 = vmatprep.subr.bf16.mxu0 0
    %216 = vmatpush1.bf16.msra.mxu0 0
    %217 = vmatprep.subr.bf16.mxu0 0
    %218 = vmatpush1.bf16.msra.mxu0 0
    %219 = vmatprep.subr.bf16.mxu0 0
    %220 = vmatpush1.bf16.msra.mxu0 0
    %221 = vmatprep.subr.bf16.mxu0 0
    %222 = vmatpush1.bf16.msra.mxu0 0
    %223 = vmatprep.subr.bf16.mxu0 0
    %224 = vmatpush1.bf16.msra.mxu0 0
    %225 = vmatprep.subr.bf16.mxu0 0
    %226 = vmatpush1.bf16.msra.mxu0 0
    %227 = vmatprep.subr.bf16.mxu0 0
    %228 = vmatpush1.bf16.msra.mxu0 0
    %229 = vmatprep.subr.bf16.mxu0 0
    %230 = vmatpush1.bf16.msra.mxu0 0
    %231 = vmatprep.subr.bf16.mxu0 0
    %232 = vmatpush1.bf16.msra.mxu0 0
    %233 = vmatprep.subr.bf16.mxu0 0
    %234 = vmatpush1.bf16.msra.mxu0 0
    %235 = vmatprep.mubr.bf16.mxu0 0
    %236 = vmatmul.mubr.bf16.gmra.mrb[0].mxu0 %v101
    %v237 = vpop.f32.mrb[0].mxu0
    %v238 = vadd.f32 0.0, %v237
    %v239 = vpop.f32.mrb[0].mxu0
    %v240 = vpop.f32.mrb[0].mxu0
    %v241 = vadd.f32 0.0, %v240
    %v242 = vpop.f32.mrb[0].mxu0
    %243 = vmatprep.mubr.bf16.mxu0 0
    %244 = vmatmul.mubr.bf16.gmra.mrb[0].mxu0 %v104
    %v245 = vpop.f32.mrb[0].mxu0
    %v246 = vadd.f32 0.0, %v245
    %v247 = vpop.f32.mrb[0].mxu0
    %v248 = vpop.f32.mrb[0].mxu0
    %v249 = vadd.f32 0.0, %v248
    %v250 = vpop.f32.mrb[0].mxu0
    %251 = vdwg.mxu0
    %v252 = vadd.f32 %v194, %v238
    %v253 = vadd.f32 %v195, %v241
    %v254 = vadd.f32 %v196, %v246
    %v255 = vadd.f32 %v197, %v249
    %s256 = scalar_lea.vmem %s4, 8
    %v257 = vld [vmem:[%s256] sm:$0xf]
    %v259 = vsel %vm106, %v257, 0
    %261 = vmatprep.subr.bf16.mxu0 0
    %262 = vmatpush1.bf16.msra.mxu0 %v259
    %263 = vmatprep.subr.bf16.mxu0 0
    %264 = vmatpush1.bf16.msra.mxu0 0
    %265 = vmatprep.subr.bf16.mxu0 0
    %266 = vmatpush1.bf16.msra.mxu0 0
    %267 = vmatprep.subr.bf16.mxu0 0
    %268 = vmatpush1.bf16.msra.mxu0 0
    %269 = vmatprep.subr.bf16.mxu0 0
    %270 = vmatpush1.bf16.msra.mxu0 0
    %271 = vmatprep.subr.bf16.mxu0 0
    %272 = vmatpush1.bf16.msra.mxu0 0
    %273 = vmatprep.subr.bf16.mxu0 0
    %274 = vmatpush1.bf16.msra.mxu0 0
    %275 = vmatprep.subr.bf16.mxu0 0
    %276 = vmatpush1.bf16.msra.mxu0 0
    %277 = vmatprep.subr.bf16.mxu0 0
    %278 = vmatpush1.bf16.msra.mxu0 0
    %279 = vmatprep.subr.bf16.mxu0 0
    %280 = vmatpush1.bf16.msra.mxu0 0
    %281 = vmatprep.subr.bf16.mxu0 0
    %282 = vmatpush1.bf16.msra.mxu0 0
    %283 = vmatprep.subr.bf16.mxu0 0
    %284 = vmatpush1.bf16.msra.mxu0 0
    %285 = vmatprep.subr.bf16.mxu0 0
    %286 = vmatpush1.bf16.msra.mxu0 0
    %287 = vmatprep.subr.bf16.mxu0 0
    %288 = vmatpush1.bf16.msra.mxu0 0
    %289 = vmatprep.subr.bf16.mxu0 0
    %290 = vmatpush1.bf16.msra.mxu0 0
    %291 = vmatprep.subr.bf16.mxu0 0
    %292 = vmatpush1.bf16.msra.mxu0 0
    %293 = vmatprep.mubr.bf16.mxu0 0
    %294 = vmatmul.mubr.bf16.gmra.mrb[0].mxu0 %v101
    %v295 = vpop.f32.mrb[0].mxu0
    %v296 = vadd.f32 0.0, %v295
    %v297 = vpop.f32.mrb[0].mxu0
    %v298 = vpop.f32.mrb[0].mxu0
    %v299 = vadd.f32 0.0, %v298
    %v300 = vpop.f32.mrb[0].mxu0
    %301 = vmatprep.mubr.bf16.mxu0 0
    %302 = vmatmul.mubr.bf16.gmra.mrb[0].mxu0 %v104
    %v303 = vpop.f32.mrb[0].mxu0
    %v304 = vadd.f32 0.0, %v303
    %v305 = vpop.f32.mrb[0].mxu0
    %v306 = vpop.f32.mrb[0].mxu0
    %v307 = vadd.f32 0.0, %v306
    %v308 = vpop.f32.mrb[0].mxu0
    %309 = vdwg.mxu0
    %v310 = vrot.slane %v296, 1
    %v311 = vrot.slane %v299, 1
    %v312 = vrot.slane %v304, 1
    %v313 = vrot.slane %v307, 1
    %vm314 = vcmp.lt.s32.totalorder %v164, 7
    %v315 = vsel %vm314, %v312, %v313
    %v316 = vsel %vm314, %v311, %v312
    %v317 = vsel %vm314, %v310, %v311
    %v318 = vsel %vm314, %v313, %v310
    %320 = vset.pattern.permute.xlu0 0
    %321 = vperm.xlu0 %320, %v67
    %v322 = vpop.permute.xlu0 %321
    %325 = vset.pattern.permute.xlu0 0
    %326 = vperm.xlu0 %325, %v68
    %v327 = vpop.permute.xlu0 %326
    %330 = vset.pattern.permute.xlu0 0
    %331 = vperm.xlu0 %330, %v69
    %v332 = vpop.permute.xlu0 %331
    %335 = vset.pattern.permute.xlu0 0
    %336 = vperm.xlu0 %335, %v70
    %v337 = vpop.permute.xlu0 %336
    %v339 = vmul.f32 %v317, %v322
    %v340 = vmul.f32 %v316, %v327
    %v341 = vmul.f32 %v315, %v332
    %v342 = vmul.f32 %v318, %v337
    %v343 = vadd.f32 %v252, %v339
    %v344 = vadd.f32 %v253, %v340
    %v345 = vadd.f32 %v254, %v341
    %v346 = vadd.f32 %v255, %v342
    %v348 = vlaneseq
    %v349 = vshrl.u32 %v348, 7
    %v350 = vsub.s32 0, %v349
    %v351 = vrot.slane %v87, %v350
    %v353 = vadd.f32 %v343, %v351
    %v354 = vadd.f32 %v344, %v351
    %v355 = vadd.f32 %v345, %v351
    %v356 = vadd.f32 %v346, %v351
    %v357 = vmax.f32 %v353, 0.0
    %v358 = vmax.f32 %v354, 0.0
    %v359 = vmax.f32 %v355, 0.0
    %v360 = vmax.f32 %v356, 0.0
    %v361 = vld [vmem:[%s6] sm:$0x1]
    %v362 = vld [vmem:[%s7] sm:$0x1]
    %vm363 = vcmask 130048
    %v364 = vsel %vm363, %v357, 0.0
    %365 = vadd.xlane.f32.xlu0 %v364
    %v366 = vpop.xlane.xlu0 %365
    %v367 = vsel %vm363, %v358, 0.0
    %368 = vadd.xlane.f32.xlu0 %v367
    %v369 = vpop.xlane.xlu0 %368
    %v370 = vsel %vm363, %v359, 0.0
    %371 = vadd.xlane.f32.xlu0 %v370
    %v372 = vpop.xlane.xlu0 %371
    %v373 = vsel %vm363, %v360, 0.0
    %374 = vadd.xlane.f32.xlu0 %v373
    %v375 = vpop.xlane.xlu0 %374
    %v376 = vmul.f32 %v357, %v357
    %v377 = vmul.f32 %v358, %v358
    %v378 = vmul.f32 %v359, %v359
    %v379 = vmul.f32 %v360, %v360
    %v380 = vsel %vm363, %v376, 0.0
    %381 = vadd.xlane.f32.xlu0 %v380
    %v382 = vpop.xlane.xlu0 %381
    %v383 = vsel %vm363, %v377, 0.0
    %384 = vadd.xlane.f32.xlu0 %v383
    %v385 = vpop.xlane.xlu0 %384
    %v386 = vsel %vm363, %v378, 0.0
    %387 = vadd.xlane.f32.xlu0 %v386
    %v388 = vpop.xlane.xlu0 %387
    %v389 = vsel %vm363, %v379, 0.0
    %390 = vadd.xlane.f32.xlu0 %v389
    %v391 = vpop.xlane.xlu0 %390
    %v392 = vmul.f32 %v366, 0.0625
    %v393 = vmul.f32 %v369, 0.0625
    %v394 = vmul.f32 %v372, 0.0625
    %v395 = vmul.f32 %v375, 0.0625
    %v396 = vmul.f32 %v382, 0.0625
    %v397 = vmul.f32 %v385, 0.0625
    %v398 = vmul.f32 %v388, 0.0625
    %v399 = vmul.f32 %v391, 0.0625
    %v400 = vmul.f32 %v392, %v392
    %v401 = vmul.f32 %v393, %v393
    %v402 = vmul.f32 %v394, %v394
    %v403 = vmul.f32 %v395, %v395
    %v404 = vsub.f32 %v396, %v400
    %v405 = vsub.f32 %v397, %v401
    %v406 = vsub.f32 %v398, %v402
    %v407 = vsub.f32 %v399, %v403
    %v408 = vsub.f32 %v357, %v392
    %v409 = vsub.f32 %v358, %v393
    %v410 = vsub.f32 %v359, %v394
    %v411 = vsub.f32 %v360, %v395
    %v412 = vadd.f32 %v404, 0.0001
    %v413 = vadd.f32 %v405, 0.0001
    %v414 = vadd.f32 %v406, 0.0001
    %v415 = vadd.f32 %v407, 0.0001
    %v416 = vrsqrt.pop %v412
    %v417 = vrsqrt.pop %v413
    %v418 = vrsqrt.pop %v414
    %v419 = vrsqrt.pop %v415
    %v420 = vmul.f32 %v408, %v416
    %v421 = vmul.f32 %v409, %v417
    %v422 = vmul.f32 %v410, %v418
    %v423 = vmul.f32 %v411, %v419
    %v425 = vlaneseq
    %v426 = vshrl.u32 %v425, 7
    %v427 = vsub.s32 0, %v426
    %v428 = vrot.slane %v361, %v427
    %v430 = vmul.f32 %v420, %v428
    %v431 = vmul.f32 %v421, %v428
    %v432 = vmul.f32 %v422, %v428
    %v433 = vmul.f32 %v423, %v428
    %v435 = vlaneseq
    %v436 = vshrl.u32 %v435, 7
    %v437 = vsub.s32 0, %v436
    %v438 = vrot.slane %v362, %v437
    %v440 = vadd.f32 %v430, %v438
    %v441 = vadd.f32 %v431, %v438
    %v442 = vadd.f32 %v432, %v438
    %v443 = vadd.f32 %v433, %v438
    %445 = vset.pattern.permute.xlu0 0
    %446 = vperm.xlu0 %445, %v51
    %v447 = vpop.permute.xlu0 %446
    %450 = vset.pattern.permute.xlu0 0
    %451 = vperm.xlu0 %450, %v52
    %v452 = vpop.permute.xlu0 %451
    %455 = vset.pattern.permute.xlu0 0
    %456 = vperm.xlu0 %455, %v53
    %v457 = vpop.permute.xlu0 %456
    %460 = vset.pattern.permute.xlu0 0
    %461 = vperm.xlu0 %460, %v54
    %v462 = vpop.permute.xlu0 %461
    %v464 = vmul.f32 %v440, %v447
    %v465 = vmul.f32 %v441, %v452
    %v466 = vmul.f32 %v442, %v457
    %v467 = vmul.f32 %v443, %v462
    %v468 = vpack.c.bf16 %v465, %v464
    %v469 = vpack.c.bf16 %v467, %v466
    %v470 = vld [vmem:[%s9] sm:$0x1]
    %v471 = vld [vmem:[%s8] sm:$0xf]
    %v472 = vld [vmem:[%s8 + $0x4] sm:$0xf]
    %v475 = vunpack.c.l.b16 %v471
    %v476 = vunpack.c.l.b16 %v472
    %v477 = vpack.c.b16 %v476, %v475
    %v480 = vsel %vm363, %v468, 0
    %v483 = vsel %vm363, %v469, 0
    %485 = vmatprep.subr.bf16.mxu0 0
    %486 = vmatpush1.bf16.msra.mxu0 %v477
    %487 = vmatprep.subr.bf16.mxu0 0
    %488 = vmatpush1.bf16.msra.mxu0 0
    %489 = vmatprep.subr.bf16.mxu0 0
    %490 = vmatpush1.bf16.msra.mxu0 0
    %491 = vmatprep.subr.bf16.mxu0 0
    %492 = vmatpush1.bf16.msra.mxu0 0
    %493 = vmatprep.subr.bf16.mxu0 0
    %494 = vmatpush1.bf16.msra.mxu0 0
    %495 = vmatprep.subr.bf16.mxu0 0
    %496 = vmatpush1.bf16.msra.mxu0 0
    %497 = vmatprep.subr.bf16.mxu0 0
    %498 = vmatpush1.bf16.msra.mxu0 0
    %499 = vmatprep.subr.bf16.mxu0 0
    %500 = vmatpush1.bf16.msra.mxu0 0
    %501 = vmatprep.subr.bf16.mxu0 0
    %502 = vmatpush1.bf16.msra.mxu0 0
    %503 = vmatprep.subr.bf16.mxu0 0
    %504 = vmatpush1.bf16.msra.mxu0 0
    %505 = vmatprep.subr.bf16.mxu0 0
    %506 = vmatpush1.bf16.msra.mxu0 0
    %507 = vmatprep.subr.bf16.mxu0 0
    %508 = vmatpush1.bf16.msra.mxu0 0
    %509 = vmatprep.subr.bf16.mxu0 0
    %510 = vmatpush1.bf16.msra.mxu0 0
    %511 = vmatprep.subr.bf16.mxu0 0
    %512 = vmatpush1.bf16.msra.mxu0 0
    %513 = vmatprep.subr.bf16.mxu0 0
    %514 = vmatpush1.bf16.msra.mxu0 0
    %515 = vmatprep.subr.bf16.mxu0 0
    %516 = vmatpush1.bf16.msra.mxu0 0
    %517 = vmatprep.mubr.bf16.mxu0 0
    %518 = vmatmul.mubr.bf16.gmra.mrb[0].mxu0 %v480
    %v519 = vpop.f32.mrb[0].mxu0
    %v520 = vadd.f32 0.0, %v519
    %v521 = vpop.f32.mrb[0].mxu0
    %v522 = vpop.f32.mrb[0].mxu0
    %v523 = vadd.f32 0.0, %v522
    %v524 = vpop.f32.mrb[0].mxu0
    %525 = vmatprep.mubr.bf16.mxu0 0
    %526 = vmatmul.mubr.bf16.gmra.mrb[0].mxu0 %v483
    %v527 = vpop.f32.mrb[0].mxu0
    %v528 = vadd.f32 0.0, %v527
    %v529 = vpop.f32.mrb[0].mxu0
    %v530 = vpop.f32.mrb[0].mxu0
    %v531 = vadd.f32 0.0, %v530
    %v532 = vpop.f32.mrb[0].mxu0
    %533 = vdwg.mxu0
    %v534 = vrot.slane %v520, 7
    %v535 = vrot.slane %v523, 7
    %v536 = vrot.slane %v528, 7
    %v537 = vrot.slane %v531, 7
    %v538 = vsel %vm165, %v536, %v537
    %v539 = vsel %vm165, %v535, %v536
    %v540 = vsel %vm165, %v534, %v535
    %v541 = vsel %vm165, %v537, %v534
    %v542 = vmul.f32 %v541, %v173
    %v543 = vmul.f32 %v540, %v178
    %v544 = vmul.f32 %v539, %v183
    %v545 = vmul.f32 %v538, %v188
    %v546 = vadd.f32 %v542, 0.0
    %v547 = vadd.f32 %v543, 0.0
    %v548 = vadd.f32 %v544, 0.0
    %v549 = vadd.f32 %v545, 0.0
    %s550 = scalar_lea.vmem %s8, 8
    %v551 = vld [vmem:[%s550] sm:$0xf]
    %v552 = vld [vmem:[%s550 + $0x4] sm:$0xf]
    %v555 = vunpack.c.l.b16 %v551
    %v556 = vunpack.c.l.b16 %v552
    %v557 = vpack.c.b16 %v556, %v555
    %559 = vmatprep.subr.bf16.mxu0 0
    %560 = vmatpush1.bf16.msra.mxu0 %v557
    %561 = vmatprep.subr.bf16.mxu0 0
    %562 = vmatpush1.bf16.msra.mxu0 0
    %563 = vmatprep.subr.bf16.mxu0 0
    %564 = vmatpush1.bf16.msra.mxu0 0
    %565 = vmatprep.subr.bf16.mxu0 0
    %566 = vmatpush1.bf16.msra.mxu0 0
    %567 = vmatprep.subr.bf16.mxu0 0
    %568 = vmatpush1.bf16.msra.mxu0 0
    %569 = vmatprep.subr.bf16.mxu0 0
    %570 = vmatpush1.bf16.msra.mxu0 0
    %571 = vmatprep.subr.bf16.mxu0 0
    %572 = vmatpush1.bf16.msra.mxu0 0
    %573 = vmatprep.subr.bf16.mxu0 0
    %574 = vmatpush1.bf16.msra.mxu0 0
    %575 = vmatprep.subr.bf16.mxu0 0
    %576 = vmatpush1.bf16.msra.mxu0 0
    %577 = vmatprep.subr.bf16.mxu0 0
    %578 = vmatpush1.bf16.msra.mxu0 0
    %579 = vmatprep.subr.bf16.mxu0 0
    %580 = vmatpush1.bf16.msra.mxu0 0
    %581 = vmatprep.subr.bf16.mxu0 0
    %582 = vmatpush1.bf16.msra.mxu0 0
    %583 = vmatprep.subr.bf16.mxu0 0
    %584 = vmatpush1.bf16.msra.mxu0 0
    %585 = vmatprep.subr.bf16.mxu0 0
    %586 = vmatpush1.bf16.msra.mxu0 0
    %587 = vmatprep.subr.bf16.mxu0 0
    %588 = vmatpush1.bf16.msra.mxu0 0
    %589 = vmatprep.subr.bf16.mxu0 0
    %590 = vmatpush1.bf16.msra.mxu0 0
    %591 = vmatprep.mubr.bf16.mxu0 0
    %592 = vmatmul.mubr.bf16.gmra.mrb[0].mxu0 %v480
    %v593 = vpop.f32.mrb[0].mxu0
    %v594 = vadd.f32 0.0, %v593
    %v595 = vpop.f32.mrb[0].mxu0
    %v596 = vpop.f32.mrb[0].mxu0
    %v597 = vadd.f32 0.0, %v596
    %v598 = vpop.f32.mrb[0].mxu0
    %599 = vmatprep.mubr.bf16.mxu0 0
    %600 = vmatmul.mubr.bf16.gmra.mrb[0].mxu0 %v483
    %v601 = vpop.f32.mrb[0].mxu0
    %v602 = vadd.f32 0.0, %v601
    %v603 = vpop.f32.mrb[0].mxu0
    %v604 = vpop.f32.mrb[0].mxu0
    %v605 = vadd.f32 0.0, %v604
    %v606 = vpop.f32.mrb[0].mxu0
    %607 = vdwg.mxu0
    %v608 = vadd.f32 %v546, %v594
    %v609 = vadd.f32 %v547, %v597
    %v610 = vadd.f32 %v548, %v602
    %v611 = vadd.f32 %v549, %v605
    %s612 = scalar_lea.vmem %s8, 16
    %v613 = vld [vmem:[%s612] sm:$0xf]
    %v614 = vld [vmem:[%s612 + $0x4] sm:$0xf]
    %v617 = vunpack.c.l.b16 %v613
    %v618 = vunpack.c.l.b16 %v614
    %v619 = vpack.c.b16 %v618, %v617
    %621 = vmatprep.subr.bf16.mxu0 0
    %622 = vmatpush1.bf16.msra.mxu0 %v619
    %623 = vmatprep.subr.bf16.mxu0 0
    %624 = vmatpush1.bf16.msra.mxu0 0
    %625 = vmatprep.subr.bf16.mxu0 0
    %626 = vmatpush1.bf16.msra.mxu0 0
    %627 = vmatprep.subr.bf16.mxu0 0
    %628 = vmatpush1.bf16.msra.mxu0 0
    %629 = vmatprep.subr.bf16.mxu0 0
    %630 = vmatpush1.bf16.msra.mxu0 0
    %631 = vmatprep.subr.bf16.mxu0 0
    %632 = vmatpush1.bf16.msra.mxu0 0
    %633 = vmatprep.subr.bf16.mxu0 0
    %634 = vmatpush1.bf16.msra.mxu0 0
    %635 = vmatprep.subr.bf16.mxu0 0
    %636 = vmatpush1.bf16.msra.mxu0 0
    %637 = vmatprep.subr.bf16.mxu0 0
    %638 = vmatpush1.bf16.msra.mxu0 0
    %639 = vmatprep.subr.bf16.mxu0 0
    %640 = vmatpush1.bf16.msra.mxu0 0
    %641 = vmatprep.subr.bf16.mxu0 0
    %642 = vmatpush1.bf16.msra.mxu0 0
    %643 = vmatprep.subr.bf16.mxu0 0
    %644 = vmatpush1.bf16.msra.mxu0 0
    %645 = vmatprep.subr.bf16.mxu0 0
    %646 = vmatpush1.bf16.msra.mxu0 0
    %647 = vmatprep.subr.bf16.mxu0 0
    %648 = vmatpush1.bf16.msra.mxu0 0
    %649 = vmatprep.subr.bf16.mxu0 0
    %650 = vmatpush1.bf16.msra.mxu0 0
    %651 = vmatprep.subr.bf16.mxu0 0
    %652 = vmatpush1.bf16.msra.mxu0 0
    %653 = vmatprep.mubr.bf16.mxu0 0
    %654 = vmatmul.mubr.bf16.gmra.mrb[0].mxu0 %v480
    %v655 = vpop.f32.mrb[0].mxu0
    %v656 = vadd.f32 0.0, %v655
    %v657 = vpop.f32.mrb[0].mxu0
    %v658 = vpop.f32.mrb[0].mxu0
    %v659 = vadd.f32 0.0, %v658
    %v660 = vpop.f32.mrb[0].mxu0
    %661 = vmatprep.mubr.bf16.mxu0 0
    %662 = vmatmul.mubr.bf16.gmra.mrb[0].mxu0 %v483
    %v663 = vpop.f32.mrb[0].mxu0
    %v664 = vadd.f32 0.0, %v663
    %v665 = vpop.f32.mrb[0].mxu0
    %v666 = vpop.f32.mrb[0].mxu0
    %v667 = vadd.f32 0.0, %v666
    %v668 = vpop.f32.mrb[0].mxu0
    %669 = vdwg.mxu0
    %v670 = vrot.slane %v656, 1
    %v671 = vrot.slane %v659, 1
    %v672 = vrot.slane %v664, 1
    %v673 = vrot.slane %v667, 1
    %v674 = vsel %vm314, %v672, %v673
    %v675 = vsel %vm314, %v671, %v672
    %v676 = vsel %vm314, %v670, %v671
    %v677 = vsel %vm314, %v673, %v670
    %v678 = vmul.f32 %v676, %v322
    %v679 = vmul.f32 %v675, %v327
    %v680 = vmul.f32 %v674, %v332
    %v681 = vmul.f32 %v677, %v337
    %v682 = vadd.f32 %v608, %v678
    %v683 = vadd.f32 %v609, %v679
    %v684 = vadd.f32 %v610, %v680
    %v685 = vadd.f32 %v611, %v681
    %v687 = vlaneseq
    %v688 = vshrl.u32 %v687, 7
    %v689 = vsub.s32 0, %v688
    %v690 = vrot.slane %v470, %v689
    %v692 = vadd.f32 %v682, %v690
    %v693 = vadd.f32 %v683, %v690
    %v694 = vadd.f32 %v684, %v690
    %v695 = vadd.f32 %v685, %v690
    %v696 = vmax.f32 %v692, 0.0
    %v697 = vmax.f32 %v693, 0.0
    %v698 = vmax.f32 %v694, 0.0
    %v699 = vmax.f32 %v695, 0.0
    %v700 = vld [vmem:[%s10] sm:$0x1]
    %v701 = vld [vmem:[%s11] sm:$0x1]
    %v702 = vsel %vm363, %v696, 0.0
    %703 = vadd.xlane.f32.xlu0 %v702
    %v704 = vpop.xlane.xlu0 %703
    %v705 = vsel %vm363, %v697, 0.0
    %706 = vadd.xlane.f32.xlu0 %v705
    %v707 = vpop.xlane.xlu0 %706
    %v708 = vsel %vm363, %v698, 0.0
    %709 = vadd.xlane.f32.xlu0 %v708
    %v710 = vpop.xlane.xlu0 %709
    %v711 = vsel %vm363, %v699, 0.0
    %712 = vadd.xlane.f32.xlu0 %v711
    %v713 = vpop.xlane.xlu0 %712
    %v714 = vmul.f32 %v696, %v696
    %v715 = vmul.f32 %v697, %v697
    %v716 = vmul.f32 %v698, %v698
    %v717 = vmul.f32 %v699, %v699
    %v718 = vsel %vm363, %v714, 0.0
    %719 = vadd.xlane.f32.xlu0 %v718
    %v720 = vpop.xlane.xlu0 %719
    %v721 = vsel %vm363, %v715, 0.0
    %722 = vadd.xlane.f32.xlu0 %v721
    %v723 = vpop.xlane.xlu0 %722
    %v724 = vsel %vm363, %v716, 0.0
    %725 = vadd.xlane.f32.xlu0 %v724
    %v726 = vpop.xlane.xlu0 %725
    %v727 = vsel %vm363, %v717, 0.0
    %728 = vadd.xlane.f32.xlu0 %v727
    %v729 = vpop.xlane.xlu0 %728
    %v730 = vmul.f32 %v704, 0.0625
    %v731 = vmul.f32 %v707, 0.0625
    %v732 = vmul.f32 %v710, 0.0625
    %v733 = vmul.f32 %v713, 0.0625
    %v734 = vmul.f32 %v720, 0.0625
    %v735 = vmul.f32 %v723, 0.0625
    %v736 = vmul.f32 %v726, 0.0625
    %v737 = vmul.f32 %v729, 0.0625
    %v738 = vmul.f32 %v730, %v730
    %v739 = vmul.f32 %v731, %v731
    %v740 = vmul.f32 %v732, %v732
    %v741 = vmul.f32 %v733, %v733
    %v742 = vsub.f32 %v734, %v738
    %v743 = vsub.f32 %v735, %v739
    %v744 = vsub.f32 %v736, %v740
    %v745 = vsub.f32 %v737, %v741
    %v746 = vsub.f32 %v696, %v730
    %v747 = vsub.f32 %v697, %v731
    %v748 = vsub.f32 %v698, %v732
    %v749 = vsub.f32 %v699, %v733
    %v750 = vadd.f32 %v742, 0.0001
    %v751 = vadd.f32 %v743, 0.0001
    %v752 = vadd.f32 %v744, 0.0001
    %v753 = vadd.f32 %v745, 0.0001
    %v754 = vrsqrt.pop %v750
    %v755 = vrsqrt.pop %v751
    %v756 = vrsqrt.pop %v752
    %v757 = vrsqrt.pop %v753
    %v758 = vmul.f32 %v746, %v754
    %v759 = vmul.f32 %v747, %v755
    %v760 = vmul.f32 %v748, %v756
    %v761 = vmul.f32 %v749, %v757
    %v763 = vlaneseq
    %v764 = vshrl.u32 %v763, 7
    %v765 = vsub.s32 0, %v764
    %v766 = vrot.slane %v700, %v765
    %v768 = vmul.f32 %v758, %v766
    %v769 = vmul.f32 %v759, %v766
    %v770 = vmul.f32 %v760, %v766
    %v771 = vmul.f32 %v761, %v766
    %v773 = vlaneseq
    %v774 = vshrl.u32 %v773, 7
    %v775 = vsub.s32 0, %v774
    %v776 = vrot.slane %v701, %v775
    %v778 = vadd.f32 %v768, %v776
    %v779 = vadd.f32 %v769, %v776
    %v780 = vadd.f32 %v770, %v776
    %v781 = vadd.f32 %v771, %v776
    %v782 = vmul.f32 %v778, %v447
    %v783 = vmul.f32 %v779, %v452
    %v784 = vmul.f32 %v780, %v457
    %v785 = vmul.f32 %v781, %v462
    %v786 = vpack.c.bf16 %v783, %v782
    %v787 = vpack.c.bf16 %v785, %v784
    %v788 = vld [vmem:[%s12] sm:$0x1]
    %v790 = vsel %vm363, %v788, 0
    %v793 = vsel %vm363, %v786, 0
    %795 = vmatprep.subr.bf16.mxu0 0
    %796 = vmatpush1.bf16.xpose.msra.mxu0 %v793
    %797 = vmatprep.subr.bf16.mxu0 0
    %798 = vmatpush1.bf16.xpose.msra.mxu0 0
    %799 = vmatprep.subr.bf16.mxu0 0
    %800 = vmatpush1.bf16.xpose.msra.mxu0 0
    %801 = vmatprep.subr.bf16.mxu0 0
    %802 = vmatpush1.bf16.xpose.msra.mxu0 0
    %803 = vmatprep.subr.bf16.mxu0 0
    %804 = vmatpush1.bf16.xpose.msra.mxu0 0
    %805 = vmatprep.subr.bf16.mxu0 0
    %806 = vmatpush1.bf16.xpose.msra.mxu0 0
    %807 = vmatprep.subr.bf16.mxu0 0
    %808 = vmatpush1.bf16.xpose.msra.mxu0 0
    %809 = vmatprep.subr.bf16.mxu0 0
    %810 = vmatpush1.bf16.xpose.msra.mxu0 0
    %811 = vmatprep.subr.bf16.mxu0 0
    %812 = vmatpush1.bf16.xpose.msra.mxu0 0
    %813 = vmatprep.subr.bf16.mxu0 0
    %814 = vmatpush1.bf16.xpose.msra.mxu0 0
    %815 = vmatprep.subr.bf16.mxu0 0
    %816 = vmatpush1.bf16.xpose.msra.mxu0 0
    %817 = vmatprep.subr.bf16.mxu0 0
    %818 = vmatpush1.bf16.xpose.msra.mxu0 0
    %819 = vmatprep.subr.bf16.mxu0 0
    %820 = vmatpush1.bf16.xpose.msra.mxu0 0
    %821 = vmatprep.subr.bf16.mxu0 0
    %822 = vmatpush1.bf16.xpose.msra.mxu0 0
    %823 = vmatprep.subr.bf16.mxu0 0
    %824 = vmatpush1.bf16.xpose.msra.mxu0 0
    %825 = vmatprep.subr.bf16.mxu0 0
    %826 = vmatpush1.bf16.xpose.msra.mxu0 0
    %827 = vmatprep.mubr.bf16.mxu0 0
    %828 = vmatmul.mubr.bf16.gmra.mrb[0].mxu0 %v790
    %v829 = vpop.f32.mrb[0].mxu0
    %v830 = vadd.f32 0.0, %v829
    %v831 = vpop.f32.mrb[0].mxu0
    %v832 = vpop.f32.mrb[0].mxu0
    %v833 = vpop.f32.mrb[0].mxu0
    %834 = vdwg.mxu0
    %v836 = vsel %vm363, %v787, 0
    %838 = vmatprep.subr.bf16.mxu0 0
    %839 = vmatpush1.bf16.xpose.msra.mxu0 %v836
    %840 = vmatprep.subr.bf16.mxu0 0
    %841 = vmatpush1.bf16.xpose.msra.mxu0 0
    %842 = vmatprep.subr.bf16.mxu0 0
    %843 = vmatpush1.bf16.xpose.msra.mxu0 0
    %844 = vmatprep.subr.bf16.mxu0 0
    %845 = vmatpush1.bf16.xpose.msra.mxu0 0
    %846 = vmatprep.subr.bf16.mxu0 0
    %847 = vmatpush1.bf16.xpose.msra.mxu0 0
    %848 = vmatprep.subr.bf16.mxu0 0
    %849 = vmatpush1.bf16.xpose.msra.mxu0 0
    %850 = vmatprep.subr.bf16.mxu0 0
    %851 = vmatpush1.bf16.xpose.msra.mxu0 0
    %852 = vmatprep.subr.bf16.mxu0 0
    %853 = vmatpush1.bf16.xpose.msra.mxu0 0
    %854 = vmatprep.subr.bf16.mxu0 0
    %855 = vmatpush1.bf16.xpose.msra.mxu0 0
    %856 = vmatprep.subr.bf16.mxu0 0
    %857 = vmatpush1.bf16.xpose.msra.mxu0 0
    %858 = vmatprep.subr.bf16.mxu0 0
    %859 = vmatpush1.bf16.xpose.msra.mxu0 0
    %860 = vmatprep.subr.bf16.mxu0 0
    %861 = vmatpush1.bf16.xpose.msra.mxu0 0
    %862 = vmatprep.subr.bf16.mxu0 0
    %863 = vmatpush1.bf16.xpose.msra.mxu0 0
    %864 = vmatprep.subr.bf16.mxu0 0
    %865 = vmatpush1.bf16.xpose.msra.mxu0 0
    %866 = vmatprep.subr.bf16.mxu0 0
    %867 = vmatpush1.bf16.xpose.msra.mxu0 0
    %868 = vmatprep.subr.bf16.mxu0 0
    %869 = vmatpush1.bf16.xpose.msra.mxu0 0
    %870 = vmatprep.mubr.bf16.mxu0 0
    %871 = vmatmul.mubr.bf16.gmra.mrb[0].mxu0 %v790
    %v872 = vpop.f32.mrb[0].mxu0
    %v873 = vadd.f32 0.0, %v872
    %v874 = vpop.f32.mrb[0].mxu0
    %v875 = vpop.f32.mrb[0].mxu0
    %v876 = vpop.f32.mrb[0].mxu0
    %877 = vdwg.mxu0
    %v879 = vrot.slane %v873, 7
    %vm881 = vcmask 1040384
    %v882 = vsel %vm881, %v830, %v879
    %v883 = vld [vmem:[#allocation2] sm:$0x1]
    %v884 = vld [vmem:[%s2] sm:$0x3]
    %v886 = vlaneseq
    %v887 = vshrl.u32 %v886, 7
    %v888 = vsub.s32 0, %v887
    %v889 = vrot.slane %v883, %v888
    %890 = vset.pattern.permute.xlu0 0
    %891 = vperm.xlu0 %890, %v889
    %v892 = vpop.permute.xlu0 %891
    %v894 = vmul.f32 %v892, %v884
    %v895 = vadd.f32 %v882, %v894
    %vm896 = vcmask 123904
    %897 = vst.msk [vmem:[#allocation3] sm:$0x3] %vm896, %v895
    // Predicated region
    $region58: #{tpu_custom_call.1} parent=1 // pred_check
      _
    $region59: #{tpu_custom_call.1} parent=1 // pred_check_branch
      %899 = sbr.rel (0) target = $region61
    $region60: #{tpu_custom_call.1} parent=1 // pred_region
      %s901 = ssub.s32 32, 32
      %902 = vsyncadd [#allocation4], %s901
      %s904 = sshll.u32 [#allocation3], 4
      %s905 = int_to_ptr.vmem [resolvable:$true] %s904
      %907 = dma.vmem_to_hbm [thread:$0]  %s905, 32, %s14, [#allocation4]
    $region61: #{tpu_custom_call.1} parent=1 // pred_fallthru
      _
    // Predicated region
    $region62: #{tpu_custom_call.1} parent=1 // pred_check
      _
    $region63: #{tpu_custom_call.1} parent=1 // pred_check_branch
      %909 = sbr.rel (0) target = $region65
    $region64: #{tpu_custom_call.1} parent=1 // pred_region
      %910 = dma.done [#allocation4], 32
    $region65: #{tpu_custom_call.1} parent=1 // pred_fallthru
      _
    %911 = vsyncpa [#allocation4], 1

</llo_original>
